<compile_context>
chip_gen: v5e
topology: v5e:2x2
jax: 0.10.0
libtpu: 0.0.40
codegen_flags: <defaults>
</compile_context>

<pallas_src>
import functools

import jax
import jax.numpy as jnp
from jax import lax
from jax.experimental import pallas as pl
from jax.experimental.pallas import tpu as pltpu

# Finite "minus infinity" for the running-max init so (m_old - m_new) and
# exp(x - m_new) never produce inf - inf = NaN for never-touched slots.
_NEG_INIT = -1.0e30


def _logits_p(sp, m, gamma):
    # torch: ap = clamp_min(-sp + 1 + m, 0); logit_p = -ap * (sp - (1 - m)) * gamma
    ap = jnp.maximum((1.0 + m) - sp, 0.0)
    return (-gamma) * ap * (sp - (1.0 - m))


def _logits_n(sn, m, gamma):
    # torch: an = clamp_min(sn + m, 0);      logit_n =  an * (sn - m) * gamma
    an = jnp.maximum(sn + m, 0.0)
    return gamma * an * (sn - m)


def _circle_loss_reference(sp, sn, *, m, gamma):
    """Pure-jnp reference (also the XLA-fused fast path for tiny inputs)."""
    sp = sp.astype(jnp.float32)
    sn = sn.astype(jnp.float32)
    lp = _logits_p(sp, float(m), float(gamma))
    ln = _logits_n(sn, float(m), float(gamma))
    z = jax.nn.logsumexp(ln, axis=0) + jax.nn.logsumexp(lp, axis=0)
    return jax.nn.softplus(z)


def _circle_loss_kernel(sp_ref, sn_ref, out_ref, m_p, s_p, m_n, s_n, *,
                        m, gamma, tp, tn, gp, gn,
                        last_p_valid, last_n_valid):
    """Streaming online-logsumexp over sp tiles (steps [0, tp)) then sn tiles
    (steps [tp, tp+tn)), finalized into softplus(lse_p + lse_n) at the end."""
    k = pl.program_id(0)
    last = tp + tn - 1

    @pl.when(k == 0)
    def _init():
        m_p[...] = jnp.full((8, 128), _NEG_INIT, jnp.float32)
        m_n[...] = jnp.full((8, 128), _NEG_INIT, jnp.float32)
        s_p[...] = jnp.zeros((8, 128), jnp.float32)
        s_n[...] = jnp.zeros((8, 128), jnp.float32)

    def accumulate(logits, m_ref, s_ref):
        # logits: (g, 8, 128) f32.  Reductions over the leading (vreg-batch)
        # axis are plain VPU elementwise ops between vregs; the (8,128)
        # accumulators stay whole vregs until the finalize step.
        t_max = jnp.max(logits, axis=0)                     # (8, 128)
        m_old = m_ref[...]
        m_new = jnp.maximum(m_old, t_max)
        p = jnp.exp(logits - m_new[None, :, :])             # ~1 exp / element
        t_sum = jnp.sum(p, axis=0)                          # (8, 128)
        s_ref[...] = s_ref[...] * jnp.exp(m_old - m_new) + t_sum
        m_ref[...] = m_new

    def masked(logits, g, n_valid):
        # Mask the (statically known) padded tail of the last tile to -inf so
        # padded elements contribute exactly 0 to the sum and never win the max.
        gi = lax.broadcasted_iota(jnp.int32, (g, 8, 128), 0)
        si = lax.broadcasted_iota(jnp.int32, (g, 8, 128), 1)
        li = lax.broadcasted_iota(jnp.int32, (g, 8, 128), 2)
        flat = (gi * 8 + si) * 128 + li
        return jnp.where(flat < n_valid, logits, -jnp.inf)

    def do_p(n_valid):
        lg = _logits_p(sp_ref[...].astype(jnp.float32), m, gamma)
        if n_valid is not None:
            lg = masked(lg, gp, n_valid)
        accumulate(lg, m_p, s_p)

    def do_n(n_valid):
        lg = _logits_n(sn_ref[...].astype(jnp.float32), m, gamma)
        if n_valid is not None:
            lg = masked(lg, gn, n_valid)
        accumulate(lg, m_n, s_n)

    # ---- positive-pair phase: grid steps [0, tp) ----------------------------
    tile_p = gp * 8 * 128
    if last_p_valid == tile_p:          # static: no ragged tile -> never mask
        @pl.when(k < tp)
        def _():
            do_p(None)
    else:
        if tp > 1:
            @pl.when(k < tp - 1)
            def _():
                do_p(None)

        @pl.when(k == tp - 1)
        def _():
            do_p(last_p_valid)

    # ---- negative-pair phase: grid steps [tp, tp + tn) ----------------------
    tile_n = gn * 8 * 128
    if last_n_valid == tile_n:
        @pl.when(k >= tp)
        def _():
            do_n(None)
    else:
        if tn > 1:
            @pl.when(jnp.logical_and(k >= tp, k < last))
            def _():
                do_n(None)

        @pl.when(k == last)
        def _():
            do_n(last_n_valid)

    # ---- finalize: one XLU collapse per array, folded logs, stable softplus -
    @pl.when(k == last)
    def _finalize():
        mp = m_p[...]
        mn = m_n[...]
        mp_max = jnp.max(mp, keepdims=True)                 # (1, 1)
        mn_max = jnp.max(mn, keepdims=True)                 # (1, 1)
        sp_tot = jnp.sum(s_p[...] * jnp.exp(mp - mp_max), keepdims=True)
        sn_tot = jnp.sum(s_n[...] * jnp.exp(mn - mn_max), keepdims=True)
        # lse_p + lse_n = mp_max + mn_max + log(Sp * Sn)   (two logs folded)
        z = mp_max + mn_max + jnp.log(sp_tot * sn_tot)
        # numerically stable softplus
        loss = jnp.maximum(z, 0.0) + jnp.log1p(jnp.exp(-jnp.abs(z)))
        out_ref[...] = loss


def _round_up(x, mult):
    return ((x + mult - 1) // mult) * mult


def _pad_to_tiles(x, tile_rows):
    """Pad a 1-D array to whole (tile_rows*128)-element tiles and reshape to a
    sublane-dense (groups, 8, 128) layout (free for 1-D row-major data)."""
    n = x.shape[0]
    tile_elems = tile_rows * 128
    n_pad = _round_up(n, tile_elems)
    if n_pad != n:
        x = jnp.pad(x, (0, n_pad - n))      # pad value is masked in-kernel
    n_tiles = n_pad // tile_elems
    last_valid = n - (n_tiles - 1) * tile_elems
    return x.reshape(n_pad // 1024, 8, 128), n_tiles, last_valid


def circle_loss(sp, sn, *, m, gamma, tile_rows=1024,
                min_pallas_elements=64 * 1024, force_pallas=False,
                vmem_limit_bytes=32 * 1024 * 1024):
    """Pallas TPU implementation of CircleLoss.forward.

    Args:
      sp: 1-D array of positive-pair similarities, shape [Np].
      sn: 1-D array of negative-pair similarities, shape [Nn].
      tile_rows: rows (of 128 lanes) per streamed tile; multiple of 8.
    Returns:
      f32 scalar loss (same forward value as the PyTorch module).
    """
    assert sp.ndim == 1 and sn.ndim == 1
    np_, nn_ = sp.shape[0], sn.shape[0]
    assert np_ >= 1 and nn_ >= 1, "empty similarity vectors are not supported"
    assert tile_rows >= 8 and tile_rows % 8 == 0

    # Tiny inputs: a Pallas launch + HBM round-trip loses to plain XLA fusion.
    if not force_pallas and (np_ + nn_) < min_pallas_elements:
        return _circle_loss_reference(sp, sn, m=m, gamma=gamma)

    # Don't use tiles (much) larger than the arrays themselves.
    tr_p = min(tile_rows, _round_up((np_ + 127) // 128, 8))
    tr_n = min(tile_rows, _round_up((nn_ + 127) // 128, 8))

    sp3, tp, last_p_valid = _pad_to_tiles(sp, tr_p)
    sn3, tn, last_n_valid = _pad_to_tiles(sn, tr_n)
    gp, gn = tr_p // 8, tr_n // 8

    kernel = functools.partial(
        _circle_loss_kernel, m=float(m), gamma=float(gamma),
        tp=tp, tn=tn, gp=gp, gn=gn,
        last_p_valid=last_p_valid, last_n_valid=last_n_valid)

    grid_spec = pltpu.PrefetchScalarGridSpec(
        num_scalar_prefetch=0,
        grid=(tp + tn,),
        in_specs=[
            # Clamped index maps: the inactive input's block index never
            # changes, so Pallas does not re-DMA it during the other phase.
            pl.BlockSpec((gp, 8, 128), lambda k: (jnp.minimum(k, tp - 1), 0, 0)),
            pl.BlockSpec((gn, 8, 128), lambda k: (jnp.maximum(k - tp, 0), 0, 0)),
        ],
        out_specs=pl.BlockSpec((1, 1), lambda k: (0, 0)),
        scratch_shapes=[pltpu.VMEM((8, 128), jnp.float32)] * 4,
    )

    out = pl.pallas_call(
        kernel,
        out_shape=jax.ShapeDtypeStruct((1, 1), jnp.float32),
        grid_spec=grid_spec,
        compiler_params=pltpu.CompilerParams(
            dimension_semantics=("arbitrary",),      # single reduction axis
            vmem_limit_bytes=vmem_limit_bytes),
    )(sp3, sn3)
    return out[0, 0]


if __name__ == "__main__":
    m, gamma = 0.25, 64.0
    key = jax.random.PRNGKey(0)
    kp, kn = jax.random.split(key)

    # Small, non-128-aligned shapes (exercise ragged-tile masking).
    Np, Nn = 2500, 5000
    sp = jax.random.uniform(kp, (Np,), jnp.float32, minval=-1.0, maxval=1.0)
    sn = jax.random.uniform(kn, (Nn,), jnp.float32, minval=-1.0, maxval=1.0)
    ref = _circle_loss_reference(sp, sn, m=m, gamma=gamma)

    # 1) Force the Pallas path with a tiny tile so the grid has several steps
    #    and both the unmasked and masked (ragged last tile) branches run.
    loss = circle_loss(sp, sn, m=m, gamma=gamma, tile_rows=8, force_pallas=True)
    jax.block_until_ready(loss)
    assert jnp.allclose(loss, ref, rtol=1e-4, atol=1e-4), (loss, ref)

    # 2) Pallas path with auto-sized tiles (single, exactly-aligned tile each).
    loss2 = circle_loss(sp[:2048], sn[:4096], m=m, gamma=gamma, force_pallas=True)
    jax.block_until_ready(loss2)
    ref2 = _circle_loss_reference(sp[:2048], sn[:4096], m=m, gamma=gamma)
    assert jnp.allclose(loss2, ref2, rtol=1e-4, atol=1e-4), (loss2, ref2)

    # 3) Tiny-input dispatch takes the fused XLA fast path.
    loss3 = circle_loss(sp[:64], sn[:96], m=m, gamma=gamma)
    jax.block_until_ready(loss3)
    ref3 = _circle_loss_reference(sp[:64], sn[:96], m=m, gamma=gamma)
    assert jnp.allclose(loss3, ref3, rtol=1e-5, atol=1e-5), (loss3, ref3)

    print("KERNEL_OK")
</pallas_src>

<mosaic_0001>
module attributes {stable_mosaic.version = 11 : i64} {
  func.func @_circle_loss_kernel(%arg0: i32, %arg1: memref<1x8x128xf32, #tpu.memory_space<vmem>>, %arg2: memref<1x8x128xf32, #tpu.memory_space<vmem>>, %arg3: memref<1x1xf32, #tpu.memory_space<vmem>>, %arg4: memref<8x128xf32, #tpu.memory_space<vmem>>, %arg5: memref<8x128xf32, #tpu.memory_space<vmem>>, %arg6: memref<8x128xf32, #tpu.memory_space<vmem>>, %arg7: memref<8x128xf32, #tpu.memory_space<vmem>>) attributes {dimension_semantics = [#tpu.dimension_semantics<arbitrary>], iteration_bounds = array<i64: 8>, scalar_prefetch = 0 : i64, scratch_operands = 4 : i64, tpu.core_type = #tpu.core_type<tc>, window_params = [{transform_indices = @transform_0, window_bounds = array<i64: 1, 8, 128>}, {transform_indices = @transform_1, window_bounds = array<i64: 1, 8, 128>}, {pipeline_mode = #tpu.pipeline_mode<synchronous>, transform_indices = @transform_2, window_bounds = array<i64: 1, 1>}]} {
    %c0_i32 = arith.constant 0 : i32
    %0 = arith.cmpi eq, %arg0, %c0_i32 : i32
    %1 = arith.extui %0 : i1 to i32
    %c0_i32_0 = arith.constant 0 : i32
    %2 = arith.cmpi ne, %1, %c0_i32_0 : i32
    scf.if %2 {
      %cst = arith.constant -1.000000e+30 : f32
      %20 = vector.broadcast %cst : f32 to vector<8x128xf32>
      %c0 = arith.constant 0 : index
      %c0_9 = arith.constant 0 : index
      %21 = vector.load %arg4[%c0, %c0_9] : memref<8x128xf32, #tpu.memory_space<vmem>>, vector<8x128xf32>
      tpu.vector_store %arg4[%c0, %c0_9], %20 {strides = array<i32>} : memref<8x128xf32, #tpu.memory_space<vmem>>, vector<8x128xf32>,
      %cst_10 = arith.constant -1.000000e+30 : f32
      %22 = vector.broadcast %cst_10 : f32 to vector<8x128xf32>
      %c0_11 = arith.constant 0 : index
      %c0_12 = arith.constant 0 : index
      %23 = vector.load %arg6[%c0_11, %c0_12] : memref<8x128xf32, #tpu.memory_space<vmem>>, vector<8x128xf32>
      tpu.vector_store %arg6[%c0_11, %c0_12], %22 {strides = array<i32>} : memref<8x128xf32, #tpu.memory_space<vmem>>, vector<8x128xf32>,
      %cst_13 = arith.constant 0.000000e+00 : f32
      %24 = vector.broadcast %cst_13 : f32 to vector<8x128xf32>
      %c0_14 = arith.constant 0 : index
      %c0_15 = arith.constant 0 : index
      %25 = vector.load %arg5[%c0_14, %c0_15] : memref<8x128xf32, #tpu.memory_space<vmem>>, vector<8x128xf32>
      tpu.vector_store %arg5[%c0_14, %c0_15], %24 {strides = array<i32>} : memref<8x128xf32, #tpu.memory_space<vmem>>, vector<8x128xf32>,
      %cst_16 = arith.constant 0.000000e+00 : f32
      %26 = vector.broadcast %cst_16 : f32 to vector<8x128xf32>
      %c0_17 = arith.constant 0 : index
      %c0_18 = arith.constant 0 : index
      %27 = vector.load %arg7[%c0_17, %c0_18] : memref<8x128xf32, #tpu.memory_space<vmem>>, vector<8x128xf32>
      tpu.vector_store %arg7[%c0_17, %c0_18], %26 {strides = array<i32>} : memref<8x128xf32, #tpu.memory_space<vmem>>, vector<8x128xf32>,
    } else {
    }
    %c2_i32 = arith.constant 2 : i32
    %3 = arith.cmpi slt, %arg0, %c2_i32 : i32
    %4 = arith.extui %3 : i1 to i32
    %c0_i32_1 = arith.constant 0 : i32
    %5 = arith.cmpi ne, %4, %c0_i32_1 : i32
    scf.if %5 {
      %c0 = arith.constant 0 : index
      %c0_9 = arith.constant 0 : index
      %c0_10 = arith.constant 0 : index
      %20 = vector.load %arg1[%c0, %c0_9, %c0_10] : memref<1x8x128xf32, #tpu.memory_space<vmem>>, vector<1x8x128xf32>
      %cst = arith.constant 1.250000e+00 : f32
      %21 = vector.broadcast %cst : f32 to vector<1x8x128xf32>
      %22 = arith.subf %21, %20 : vector<1x8x128xf32>
      %cst_11 = arith.constant 0.000000e+00 : f32
      %23 = vector.broadcast %cst_11 : f32 to vector<1x8x128xf32>
      %24 = arith.maximumf %22, %23 : vector<1x8x128xf32>
      %cst_12 = arith.constant -6.400000e+01 : f32
      %25 = vector.broadcast %cst_12 : f32 to vector<1x8x128xf32>
      %26 = arith.mulf %25, %24 : vector<1x8x128xf32>
      %cst_13 = arith.constant 7.500000e-01 : f32
      %27 = vector.broadcast %cst_13 : f32 to vector<1x8x128xf32>
      %28 = arith.subf %20, %27 : vector<1x8x128xf32>
      %29 = arith.mulf %26, %28 : vector<1x8x128xf32>
      %cst_14 = arith.constant dense<0xFF800000> : vector<8x128xf32>
      %30 = vector.multi_reduction <maximumf>, %29, %cst_14 [0] : vector<1x8x128xf32> to vector<8x128xf32>
      %c0_15 = arith.constant 0 : index
      %c0_16 = arith.constant 0 : index
      %31 = vector.load %arg4[%c0_15, %c0_16] : memref<8x128xf32, #tpu.memory_space<vmem>>, vector<8x128xf32>
      %32 = arith.maximumf %31, %30 : vector<8x128xf32>
      %33 = vector.shape_cast %32 : vector<8x128xf32> to vector<1x8x128xf32>
      %34 = arith.subf %29, %33 : vector<1x8x128xf32>
      %35 = math.exp %34 : vector<1x8x128xf32>
      %cst_17 = arith.constant dense<0.000000e+00> : vector<8x128xf32>
      %36 = vector.multi_reduction <add>, %35, %cst_17 [0] : vector<1x8x128xf32> to vector<8x128xf32>
      %c0_18 = arith.constant 0 : index
      %c0_19 = arith.constant 0 : index
      %37 = vector.load %arg5[%c0_18, %c0_19] : memref<8x128xf32, #tpu.memory_space<vmem>>, vector<8x128xf32>
      %38 = arith.subf %31, %32 : vector<8x128xf32>
      %39 = math.exp %38 : vector<8x128xf32>
      %40 = arith.mulf %37, %39 : vector<8x128xf32>
      %41 = arith.addf %40, %36 : vector<8x128xf32>
      %c0_20 = arith.constant 0 : index
      %c0_21 = arith.constant 0 : index
      %42 = vector.load %arg5[%c0_20, %c0_21] : memref<8x128xf32, #tpu.memory_space<vmem>>, vector<8x128xf32>
      tpu.vector_store %arg5[%c0_20, %c0_21], %41 {strides = array<i32>} : memref<8x128xf32, #tpu.memory_space<vmem>>, vector<8x128xf32>,
      %c0_22 = arith.constant 0 : index
      %c0_23 = arith.constant 0 : index
      %43 = vector.load %arg4[%c0_22, %c0_23] : memref<8x128xf32, #tpu.memory_space<vmem>>, vector<8x128xf32>
      tpu.vector_store %arg4[%c0_22, %c0_23], %32 {strides = array<i32>} : memref<8x128xf32, #tpu.memory_space<vmem>>, vector<8x128xf32>,
    } else {
    }
    %c2_i32_2 = arith.constant 2 : i32
    %6 = arith.cmpi eq, %arg0, %c2_i32_2 : i32
    %7 = arith.extui %6 : i1 to i32
    %c0_i32_3 = arith.constant 0 : i32
    %8 = arith.cmpi ne, %7, %c0_i32_3 : i32
    scf.if %8 {
      %c0 = arith.constant 0 : index
      %c0_9 = arith.constant 0 : index
      %c0_10 = arith.constant 0 : index
      %20 = vector.load %arg1[%c0, %c0_9, %c0_10] : memref<1x8x128xf32, #tpu.memory_space<vmem>>, vector<1x8x128xf32>
      %cst = arith.constant 1.250000e+00 : f32
      %21 = vector.broadcast %cst : f32 to vector<1x8x128xf32>
      %22 = arith.subf %21, %20 : vector<1x8x128xf32>
      %cst_11 = arith.constant 0.000000e+00 : f32
      %23 = vector.broadcast %cst_11 : f32 to vector<1x8x128xf32>
      %24 = arith.maximumf %22, %23 : vector<1x8x128xf32>
      %cst_12 = arith.constant -6.400000e+01 : f32
      %25 = vector.broadcast %cst_12 : f32 to vector<1x8x128xf32>
      %26 = arith.mulf %25, %24 : vector<1x8x128xf32>
      %cst_13 = arith.constant 7.500000e-01 : f32
      %27 = vector.broadcast %cst_13 : f32 to vector<1x8x128xf32>
      %28 = arith.subf %20, %27 : vector<1x8x128xf32>
      %29 = arith.mulf %26, %28 : vector<1x8x128xf32>
      %30 = tpu.iota {dimensions = array<i32: 0>} : vector<1x8x128xi32>
      %31 = tpu.iota {dimensions = array<i32: 1>} : vector<1x8x128xi32>
      %32 = tpu.iota {dimensions = array<i32: 2>} : vector<1x8x128xi32>
      %c8_i32 = arith.constant 8 : i32
      %33 = vector.broadcast %c8_i32 : i32 to vector<1x8x128xi32>
      %34 = arith.muli %30, %33 : vector<1x8x128xi32>
      %35 = arith.addi %34, %31 : vector<1x8x128xi32>
      %c128_i32 = arith.constant 128 : i32
      %36 = vector.broadcast %c128_i32 : i32 to vector<1x8x128xi32>
      %37 = arith.muli %35, %36 : vector<1x8x128xi32>
      %38 = arith.addi %37, %32 : vector<1x8x128xi32>
      %c452_i32 = arith.constant 452 : i32
      %39 = vector.broadcast %c452_i32 : i32 to vector<1x8x128xi32>
      %40 = arith.cmpi slt, %38, %39 : vector<1x8x128xi32>
      %cst_14 = arith.constant 0xFF800000 : f32
      %41 = vector.broadcast %cst_14 : f32 to vector<1x8x128xf32>
      %42 = arith.select %40, %29, %41 : vector<1x8x128xi1>, vector<1x8x128xf32>
      %cst_15 = arith.constant dense<0xFF800000> : vector<8x128xf32>
      %43 = vector.multi_reduction <maximumf>, %42, %cst_15 [0] : vector<1x8x128xf32> to vector<8x128xf32>
      %c0_16 = arith.constant 0 : index
      %c0_17 = arith.constant 0 : index
      %44 = vector.load %arg4[%c0_16, %c0_17] : memref<8x128xf32, #tpu.memory_space<vmem>>, vector<8x128xf32>
      %45 = arith.maximumf %44, %43 : vector<8x128xf32>
      %46 = vector.shape_cast %45 : vector<8x128xf32> to vector<1x8x128xf32>
      %47 = arith.subf %42, %46 : vector<1x8x128xf32>
      %48 = math.exp %47 : vector<1x8x128xf32>
      %cst_18 = arith.constant dense<0.000000e+00> : vector<8x128xf32>
      %49 = vector.multi_reduction <add>, %48, %cst_18 [0] : vector<1x8x128xf32> to vector<8x128xf32>
      %c0_19 = arith.constant 0 : index
      %c0_20 = arith.constant 0 : index
      %50 = vector.load %arg5[%c0_19, %c0_20] : memref<8x128xf32, #tpu.memory_space<vmem>>, vector<8x128xf32>
      %51 = arith.subf %44, %45 : vector<8x128xf32>
      %52 = math.exp %51 : vector<8x128xf32>
      %53 = arith.mulf %50, %52 : vector<8x128xf32>
      %54 = arith.addf %53, %49 : vector<8x128xf32>
      %c0_21 = arith.constant 0 : index
      %c0_22 = arith.constant 0 : index
      %55 = vector.load %arg5[%c0_21, %c0_22] : memref<8x128xf32, #tpu.memory_space<vmem>>, vector<8x128xf32>
      tpu.vector_store %arg5[%c0_21, %c0_22], %54 {strides = array<i32>} : memref<8x128xf32, #tpu.memory_space<vmem>>, vector<8x128xf32>,
      %c0_23 = arith.constant 0 : index
      %c0_24 = arith.constant 0 : index
      %56 = vector.load %arg4[%c0_23, %c0_24] : memref<8x128xf32, #tpu.memory_space<vmem>>, vector<8x128xf32>
      tpu.vector_store %arg4[%c0_23, %c0_24], %45 {strides = array<i32>} : memref<8x128xf32, #tpu.memory_space<vmem>>, vector<8x128xf32>,
    } else {
    }
    %c3_i32 = arith.constant 3 : i32
    %9 = arith.cmpi sge, %arg0, %c3_i32 : i32
    %c7_i32 = arith.constant 7 : i32
    %10 = arith.cmpi slt, %arg0, %c7_i32 : i32
    %11 = arith.andi %9, %10 : i1
    %12 = arith.extui %11 : i1 to i32
    %c0_i32_4 = arith.constant 0 : i32
    %13 = arith.cmpi ne, %12, %c0_i32_4 : i32
    scf.if %13 {
      %c0 = arith.constant 0 : index
      %c0_9 = arith.constant 0 : index
      %c0_10 = arith.constant 0 : index
      %20 = vector.load %arg2[%c0, %c0_9, %c0_10] : memref<1x8x128xf32, #tpu.memory_space<vmem>>, vector<1x8x128xf32>
      %cst = arith.constant 2.500000e-01 : f32
      %21 = vector.broadcast %cst : f32 to vector<1x8x128xf32>
      %22 = arith.addf %20, %21 : vector<1x8x128xf32>
      %cst_11 = arith.constant 0.000000e+00 : f32
      %23 = vector.broadcast %cst_11 : f32 to vector<1x8x128xf32>
      %24 = arith.maximumf %22, %23 : vector<1x8x128xf32>
      %cst_12 = arith.constant 6.400000e+01 : f32
      %25 = vector.broadcast %cst_12 : f32 to vector<1x8x128xf32>
      %26 = arith.mulf %25, %24 : vector<1x8x128xf32>
      %cst_13 = arith.constant 2.500000e-01 : f32
      %27 = vector.broadcast %cst_13 : f32 to vector<1x8x128xf32>
      %28 = arith.subf %20, %27 : vector<1x8x128xf32>
      %29 = arith.mulf %26, %28 : vector<1x8x128xf32>
      %cst_14 = arith.constant dense<0xFF800000> : vector<8x128xf32>
      %30 = vector.multi_reduction <maximumf>, %29, %cst_14 [0] : vector<1x8x128xf32> to vector<8x128xf32>
      %c0_15 = arith.constant 0 : index
      %c0_16 = arith.constant 0 : index
      %31 = vector.load %arg6[%c0_15, %c0_16] : memref<8x128xf32, #tpu.memory_space<vmem>>, vector<8x128xf32>
      %32 = arith.maximumf %31, %30 : vector<8x128xf32>
      %33 = vector.shape_cast %32 : vector<8x128xf32> to vector<1x8x128xf32>
      %34 = arith.subf %29, %33 : vector<1x8x128xf32>
      %35 = math.exp %34 : vector<1x8x128xf32>
      %cst_17 = arith.constant dense<0.000000e+00> : vector<8x128xf32>
      %36 = vector.multi_reduction <add>, %35, %cst_17 [0] : vector<1x8x128xf32> to vector<8x128xf32>
      %c0_18 = arith.constant 0 : index
      %c0_19 = arith.constant 0 : index
      %37 = vector.load %arg7[%c0_18, %c0_19] : memref<8x128xf32, #tpu.memory_space<vmem>>, vector<8x128xf32>
      %38 = arith.subf %31, %32 : vector<8x128xf32>
      %39 = math.exp %38 : vector<8x128xf32>
      %40 = arith.mulf %37, %39 : vector<8x128xf32>
      %41 = arith.addf %40, %36 : vector<8x128xf32>
      %c0_20 = arith.constant 0 : index
      %c0_21 = arith.constant 0 : index
      %42 = vector.load %arg7[%c0_20, %c0_21] : memref<8x128xf32, #tpu.memory_space<vmem>>, vector<8x128xf32>
      tpu.vector_store %arg7[%c0_20, %c0_21], %41 {strides = array<i32>} : memref<8x128xf32, #tpu.memory_space<vmem>>, vector<8x128xf32>,
      %c0_22 = arith.constant 0 : index
      %c0_23 = arith.constant 0 : index
      %43 = vector.load %arg6[%c0_22, %c0_23] : memref<8x128xf32, #tpu.memory_space<vmem>>, vector<8x128xf32>
      tpu.vector_store %arg6[%c0_22, %c0_23], %32 {strides = array<i32>} : memref<8x128xf32, #tpu.memory_space<vmem>>, vector<8x128xf32>,
    } else {
    }
    %c7_i32_5 = arith.constant 7 : i32
    %14 = arith.cmpi eq, %arg0, %c7_i32_5 : i32
    %15 = arith.extui %14 : i1 to i32
    %c0_i32_6 = arith.constant 0 : i32
    %16 = arith.cmpi ne, %15, %c0_i32_6 : i32
    scf.if %16 {
      %c0 = arith.constant 0 : index
      %c0_9 = arith.constant 0 : index
      %c0_10 = arith.constant 0 : index
      %20 = vector.load %arg2[%c0, %c0_9, %c0_10] : memref<1x8x128xf32, #tpu.memory_space<vmem>>, vector<1x8x128xf32>
      %cst = arith.constant 2.500000e-01 : f32
      %21 = vector.broadcast %cst : f32 to vector<1x8x128xf32>
      %22 = arith.addf %20, %21 : vector<1x8x128xf32>
      %cst_11 = arith.constant 0.000000e+00 : f32
      %23 = vector.broadcast %cst_11 : f32 to vector<1x8x128xf32>
      %24 = arith.maximumf %22, %23 : vector<1x8x128xf32>
      %cst_12 = arith.constant 6.400000e+01 : f32
      %25 = vector.broadcast %cst_12 : f32 to vector<1x8x128xf32>
      %26 = arith.mulf %25, %24 : vector<1x8x128xf32>
      %cst_13 = arith.constant 2.500000e-01 : f32
      %27 = vector.broadcast %cst_13 : f32 to vector<1x8x128xf32>
      %28 = arith.subf %20, %27 : vector<1x8x128xf32>
      %29 = arith.mulf %26, %28 : vector<1x8x128xf32>
      %30 = tpu.iota {dimensions = array<i32: 0>} : vector<1x8x128xi32>
      %31 = tpu.iota {dimensions = array<i32: 1>} : vector<1x8x128xi32>
      %32 = tpu.iota {dimensions = array<i32: 2>} : vector<1x8x128xi32>
      %c8_i32 = arith.constant 8 : i32
      %33 = vector.broadcast %c8_i32 : i32 to vector<1x8x128xi32>
      %34 = arith.muli %30, %33 : vector<1x8x128xi32>
      %35 = arith.addi %34, %31 : vector<1x8x128xi32>
      %c128_i32 = arith.constant 128 : i32
      %36 = vector.broadcast %c128_i32 : i32 to vector<1x8x128xi32>
      %37 = arith.muli %35, %36 : vector<1x8x128xi32>
      %38 = arith.addi %37, %32 : vector<1x8x128xi32>
      %c904_i32 = arith.constant 904 : i32
      %39 = vector.broadcast %c904_i32 : i32 to vector<1x8x128xi32>
      %40 = arith.cmpi slt, %38, %39 : vector<1x8x128xi32>
      %cst_14 = arith.constant 0xFF800000 : f32
      %41 = vector.broadcast %cst_14 : f32 to vector<1x8x128xf32>
      %42 = arith.select %40, %29, %41 : vector<1x8x128xi1>, vector<1x8x128xf32>
      %cst_15 = arith.constant dense<0xFF800000> : vector<8x128xf32>
      %43 = vector.multi_reduction <maximumf>, %42, %cst_15 [0] : vector<1x8x128xf32> to vector<8x128xf32>
      %c0_16 = arith.constant 0 : index
      %c0_17 = arith.constant 0 : index
      %44 = vector.load %arg6[%c0_16, %c0_17] : memref<8x128xf32, #tpu.memory_space<vmem>>, vector<8x128xf32>
      %45 = arith.maximumf %44, %43 : vector<8x128xf32>
      %46 = vector.shape_cast %45 : vector<8x128xf32> to vector<1x8x128xf32>
      %47 = arith.subf %42, %46 : vector<1x8x128xf32>
      %48 = math.exp %47 : vector<1x8x128xf32>
      %cst_18 = arith.constant dense<0.000000e+00> : vector<8x128xf32>
      %49 = vector.multi_reduction <add>, %48, %cst_18 [0] : vector<1x8x128xf32> to vector<8x128xf32>
      %c0_19 = arith.constant 0 : index
      %c0_20 = arith.constant 0 : index
      %50 = vector.load %arg7[%c0_19, %c0_20] : memref<8x128xf32, #tpu.memory_space<vmem>>, vector<8x128xf32>
      %51 = arith.subf %44, %45 : vector<8x128xf32>
      %52 = math.exp %51 : vector<8x128xf32>
      %53 = arith.mulf %50, %52 : vector<8x128xf32>
      %54 = arith.addf %53, %49 : vector<8x128xf32>
      %c0_21 = arith.constant 0 : index
      %c0_22 = arith.constant 0 : index
      %55 = vector.load %arg7[%c0_21, %c0_22] : memref<8x128xf32, #tpu.memory_space<vmem>>, vector<8x128xf32>
      tpu.vector_store %arg7[%c0_21, %c0_22], %54 {strides = array<i32>} : memref<8x128xf32, #tpu.memory_space<vmem>>, vector<8x128xf32>,
      %c0_23 = arith.constant 0 : index
      %c0_24 = arith.constant 0 : index
      %56 = vector.load %arg6[%c0_23, %c0_24] : memref<8x128xf32, #tpu.memory_space<vmem>>, vector<8x128xf32>
      tpu.vector_store %arg6[%c0_23, %c0_24], %45 {strides = array<i32>} : memref<8x128xf32, #tpu.memory_space<vmem>>, vector<8x128xf32>,
    } else {
    }
    %c7_i32_7 = arith.constant 7 : i32
    %17 = arith.cmpi eq, %arg0, %c7_i32_7 : i32
    %18 = arith.extui %17 : i1 to i32
    %c0_i32_8 = arith.constant 0 : i32
    %19 = arith.cmpi ne, %18, %c0_i32_8 : i32
    scf.if %19 {
      %c0 = arith.constant 0 : index
      %c0_9 = arith.constant 0 : index
      %20 = vector.load %arg4[%c0, %c0_9] : memref<8x128xf32, #tpu.memory_space<vmem>>, vector<8x128xf32>
      %c0_10 = arith.constant 0 : index
      %c0_11 = arith.constant 0 : index
      %21 = vector.load %arg6[%c0_10, %c0_11] : memref<8x128xf32, #tpu.memory_space<vmem>>, vector<8x128xf32>
      %22 = vector.shape_cast %20 : vector<8x128xf32> to vector<1x8x128xf32>
      %cst = arith.constant dense<0xFF800000> : vector<1xf32>
      %23 = vector.multi_reduction <maximumf>, %22, %cst [1, 2] : vector<1x8x128xf32> to vector<1xf32>
      %24 = vector.shape_cast %23 : vector<1xf32> to vector<1x1x1xf32>
      %25 = vector.extract %24[0, 0, 0] : f32 from vector<1x1x1xf32>
      %26 = vector.broadcast %25 : f32 to vector<1x1xf32>
      %27 = vector.shape_cast %21 : vector<8x128xf32> to vector<1x8x128xf32>
      %cst_12 = arith.constant dense<0xFF800000> : vector<1xf32>
      %28 = vector.multi_reduction <maximumf>, %27, %cst_12 [1, 2] : vector<1x8x128xf32> to vector<1xf32>
      %29 = vector.shape_cast %28 : vector<1xf32> to vector<1x1x1xf32>
      %30 = vector.extract %29[0, 0, 0] : f32 from vector<1x1x1xf32>
      %31 = vector.broadcast %30 : f32 to vector<1x1xf32>
      %c0_13 = arith.constant 0 : index
      %c0_14 = arith.constant 0 : index
      %32 = vector.load %arg5[%c0_13, %c0_14] : memref<8x128xf32, #tpu.memory_space<vmem>>, vector<8x128xf32>
      %33 = vector.broadcast %26 : vector<1x1xf32> to vector<8x128xf32>
      %34 = arith.subf %20, %33 : vector<8x128xf32>
      %35 = math.exp %34 : vector<8x128xf32>
      %36 = arith.mulf %32, %35 : vector<8x128xf32>
      %37 = vector.shape_cast %36 : vector<8x128xf32> to vector<1x8x128xf32>
      %cst_15 = arith.constant dense<0.000000e+00> : vector<1xf32>
      %38 = vector.multi_reduction <add>, %37, %cst_15 [1, 2] : vector<1x8x128xf32> to vector<1xf32>
      %39 = vector.shape_cast %38 : vector<1xf32> to vector<1x1x1xf32>
      %40 = vector.extract %39[0, 0, 0] : f32 from vector<1x1x1xf32>
      %41 = vector.broadcast %40 : f32 to vector<1x1xf32>
      %c0_16 = arith.constant 0 : index
      %c0_17 = arith.constant 0 : index
      %42 = vector.load %arg7[%c0_16, %c0_17] : memref<8x128xf32, #tpu.memory_space<vmem>>, vector<8x128xf32>
      %43 = vector.broadcast %31 : vector<1x1xf32> to vector<8x128xf32>
      %44 = arith.subf %21, %43 : vector<8x128xf32>
      %45 = math.exp %44 : vector<8x128xf32>
      %46 = arith.mulf %42, %45 : vector<8x128xf32>
      %47 = vector.shape_cast %46 : vector<8x128xf32> to vector<1x8x128xf32>
      %cst_18 = arith.constant dense<0.000000e+00> : vector<1xf32>
      %48 = vector.multi_reduction <add>, %47, %cst_18 [1, 2] : vector<1x8x128xf32> to vector<1xf32>
      %49 = vector.shape_cast %48 : vector<1xf32> to vector<1x1x1xf32>
      %50 = vector.extract %49[0, 0, 0] : f32 from vector<1x1x1xf32>
      %51 = vector.broadcast %50 : f32 to vector<1x1xf32>
      %52 = arith.addf %26, %31 : vector<1x1xf32>
      %53 = arith.mulf %41, %51 : vector<1x1xf32>
      %54 = math.log %53 : vector<1x1xf32>
      %55 = arith.addf %52, %54 : vector<1x1xf32>
      %cst_19 = arith.constant 0.000000e+00 : f32
      %56 = vector.broadcast %cst_19 : f32 to vector<1x1xf32>
      %57 = arith.maximumf %55, %56 : vector<1x1xf32>
      %58 = math.absf %55 : vector<1x1xf32>
      %cst_20 = arith.constant 0.000000e+00 : f32
      %59 = vector.broadcast %cst_20 : f32 to vector<1x1xf32>
      %60 = arith.subf %59, %58 : vector<1x1xf32>
      %61 = math.exp %60 : vector<1x1xf32>
      %62 = math.log1p %61 : vector<1x1xf32>
      %63 = arith.addf %57, %62 : vector<1x1xf32>
      %c0_21 = arith.constant 0 : index
      %c0_22 = arith.constant 0 : index
      %64 = vector.load %arg3[%c0_21, %c0_22] : memref<1x1xf32, #tpu.memory_space<vmem>>, vector<1x1xf32>
      tpu.vector_store %arg3[%c0_21, %c0_22], %63 {strides = array<i32>} : memref<1x1xf32, #tpu.memory_space<vmem>>, vector<1x1xf32>,
    } else {
    }
    return
  }
  func.func @transform_0(%arg0: i32) -> (i32, i32, i32) {
    %c2_i32 = arith.constant 2 : i32
    %0 = arith.minsi %arg0, %c2_i32 : i32
    %c0_i32 = arith.constant 0 : i32
    %c0_i32_0 = arith.constant 0 : i32
    %c0_i32_1 = arith.constant 0 : i32
    return %0, %c0_i32, %c0_i32_0 : i32, i32, i32
  }
  func.func @transform_1(%arg0: i32) -> (i32, i32, i32) {
    %c3_i32 = arith.constant 3 : i32
    %0 = arith.subi %arg0, %c3_i32 : i32
    %c0_i32 = arith.constant 0 : i32
    %1 = arith.maxsi %0, %c0_i32 : i32
    %c0_i32_0 = arith.constant 0 : i32
    %c0_i32_1 = arith.constant 0 : i32
    %c0_i32_2 = arith.constant 0 : i32
    return %1, %c0_i32_0, %c0_i32_1 : i32, i32, i32
  }
  func.func @transform_2(%arg0: i32) -> (i32, i32) {
    %c0_i32 = arith.constant 0 : i32
    %c0_i32_0 = arith.constant 0 : i32
    %c0_i32_1 = arith.constant 0 : i32
    return %c0_i32, %c0_i32_0 : i32, i32
  }
}

</mosaic_0001>

<llo_original>
// kernel: tpu_custom_call.1
$region0: #{tpu_custom_call.1}
  #allocation0 [shape = 'u32[]', space=smem, size = 0x4, offset = 0x4, fixed_abs, tag = 'smem constant byte address 0x4 - core index']
  #allocation1 [shape = 'u32[72,128]{1,0:T(1,128)}', space=vmem, size = 0x9000, scoped, tag = 'internal scratch']
  #allocation2 [shape = 'f32[8,128]{1,0:T(8,128)}', space=vmem, size = 0x1000, scoped, tag = 'scratch operand']
  #allocation3 [shape = 'f32[8,128]{1,0:T(8,128)}', space=vmem, size = 0x1000, scoped, tag = 'scratch operand']
  #allocation4 [shape = 'f32[8,128]{1,0:T(8,128)}', space=vmem, size = 0x1000, scoped, tag = 'scratch operand']
  #allocation5 [shape = 'f32[8,128]{1,0:T(8,128)}', space=vmem, size = 0x1000, scoped, tag = 'scratch operand']
  %s0 = inlined_call_operand.hbm [shape: f32[3,8,128], index: 0, kind: input, shape index: {}]
  %s1 = inlined_call_operand.hbm [shape: f32[5,8,128], index: 1, kind: input, shape index: {}]
  %s2 = inlined_call_operand.hbm [shape: f32[1,1], index: 2, kind: output, shape index: {}]
  %s3 = sld [smem:[#allocation0]]
  $region69: #{tpu_custom_call.1} parent=0
    _
  %s5 = ssub.s32 1, %s3
  %s6 = scalar_select 0, %s5, %s3
  $region1: #{tpu_custom_call.1} parent=0
    #allocation6 [shape = 'u8[8192]{0}', space=vmem, size = 0x2000, scoped, tag = 'input window, operand 0']
    #allocation7 [shape = 's32[2]{0}', space=sflag, size = 0x8, scoped, tag = 'scoped memory for tpu_custom_call.1']
    #allocation8 [shape = 's32[2]{0}', space=sflag, size = 0x8, scoped, tag = 'scoped memory for tpu_custom_call.1']
    #allocation9 [shape = 'u8[8192]{0}', space=vmem, size = 0x2000, scoped, tag = 'input window, operand 1']
    #allocation10 [shape = 's32[2]{0}', space=sflag, size = 0x8, scoped, tag = 'scoped memory for tpu_custom_call.1']
    #allocation11 [shape = 'u8[512]{0}', space=vmem, size = 0x400, scoped, tag = 'output window, operand 0, single buffered']
    %7 = vsyncpa [#allocation7], 0
    %s8 = scalar_lea.sflag [#allocation7], 1
    %9 = vsyncpa %s8, 0
    %10 = vsyncpa [#allocation10], 0
    %s11 = scalar_lea.sflag [#allocation10], 1
    %12 = vsyncpa %s11, 0
    %13 = vsyncpa [#allocation8], 0
    loop: start=0, step=1, limit=10
    $region2: #{tpu_custom_call.1} parent=1 // loop_pre_header
      _
    $region3: #{tpu_custom_call.1} parent=1 // loop_header
      %s15 = sphi 0, %s19
      %p16 = scmp.ge.s32.totalorder %s15, 10
      %s29 = sphi 0, %s31
      %s32 = sphi 0, %s29
      %s33 = sphi 0, %s32
      %s49 = sphi 0, %s33
      %s61 = sphi 0, %s63
      %s64 = sphi 0, %s61
      %s65 = sphi 0, %s64
      %s81 = sphi 0, %s65
      %s85 = sphi 0, %s85
      %s87 = sphi 0, %s85
      %s88 = sphi 0, %s87
      %s102 = sphi 0, %s88
    $region4: #{tpu_custom_call.1} parent=1 // loop_header_branch
      %18 = sbr.rel (%p16) target = $region8
    $region5: #{tpu_custom_call.1} parent=1 // loop_body
      %s20 = ssub.s32 %s15, 1
      %s21 = ssub.s32 %s15, 2
      %s22 = sadd.s32 %s15, 1
      %p23 = scmp.lt.s32.totalorder %s15, 2
      %s24 = scalar_select %p23, %s15, 2
      %p25 = scmp.lt.s32.totalorder %s22, 2
      %s26 = scalar_select %p25, %s22, 2
      %s27 = ssub.s32 %s24, %s26
      %p28 = scmp.eq.s32.totalorder %s27, 0
      %s30 = sadd.s32 %s29, 1
      %s31 = scalar_select %p28, %s29, %s30
      %p34 = pneg %p28
      %p35 = scmp.eq.s32.totalorder %s15, 7
      %p36 = por %p34, %p35
      %p37 = scmp.ne.s32.totalorder %s29, %s32
      %p38 = scmp.eq.s32.totalorder %s15, 0
      %p39 = por %p37, %p38
      %p40 = scmp.ne.s32.totalorder %s29, %s32
      %p41 = scmp.eq.s32.totalorder %s20, 7
      %p42 = por %p40, %p41
      %p43 = scmp.ne.s32.totalorder %s32, %s33
      %p44 = scmp.eq.s32.totalorder %s20, 0
      %p45 = por %p43, %p44
      %p46 = scmp.ne.s32.totalorder %s32, %s33
      %p47 = scmp.eq.s32.totalorder %s21, 7
      %p48 = por %p46, %p47
      %p50 = scmp.ne.s32.totalorder %s33, %s49
      %p51 = scmp.eq.s32.totalorder %s21, 0
      %p52 = por %p50, %p51
      %s53 = ssub.s32 %s15, 3
      %p54 = scmp.gt.s32.totalorder %s53, 0
      %s55 = scalar_select %p54, %s53, 0
      %s56 = ssub.s32 %s22, 3
      %p57 = scmp.gt.s32.totalorder %s56, 0
      %s58 = scalar_select %p57, %s56, 0
      %s59 = ssub.s32 %s55, %s58
      %p60 = scmp.eq.s32.totalorder %s59, 0
      %s62 = sadd.s32 %s61, 1
      %s63 = scalar_select %p60, %s61, %s62
      %p66 = pneg %p60
      %p67 = scmp.eq.s32.totalorder %s15, 7
      %p68 = por %p66, %p67
      %p69 = scmp.ne.s32.totalorder %s61, %s64
      %p70 = scmp.eq.s32.totalorder %s15, 0
      %p71 = por %p69, %p70
      %p72 = scmp.ne.s32.totalorder %s61, %s64
      %p73 = scmp.eq.s32.totalorder %s20, 7
      %p74 = por %p72, %p73
      %p75 = scmp.ne.s32.totalorder %s64, %s65
      %p76 = scmp.eq.s32.totalorder %s20, 0
      %p77 = por %p75, %p76
      %p78 = scmp.ne.s32.totalorder %s64, %s65
      %p79 = scmp.eq.s32.totalorder %s21, 7
      %p80 = por %p78, %p79
      %p82 = scmp.ne.s32.totalorder %s65, %s81
      %p83 = scmp.eq.s32.totalorder %s21, 0
      %p84 = por %p82, %p83
      %s86 = sadd.s32 %s85, 1
      %p89 = scmp.eq.s32.totalorder %s15, 7
      %p90 = scmp.ne.s32.totalorder %s85, %s87
      %p91 = scmp.eq.s32.totalorder %s15, 0
      %p92 = por %p90, %p91
      %p93 = scmp.ne.s32.totalorder %s85, %s87
      %p94 = scmp.eq.s32.totalorder %s20, 7
      %p95 = por %p93, %p94
      %p96 = scmp.ne.s32.totalorder %s87, %s88
      %p97 = scmp.eq.s32.totalorder %s20, 0
      %p98 = por %p96, %p97
      %p99 = scmp.ne.s32.totalorder %s87, %s88
      %p100 = scmp.eq.s32.totalorder %s21, 7
      %p101 = por %p99, %p100
      %p103 = scmp.ne.s32.totalorder %s88, %s102
      %p104 = scmp.eq.s32.totalorder %s21, 0
      %p105 = por %p103, %p104
      %p106 = scmp.le.s32.totalorder 1, %s15
      %p107 = scmp.lt.s32.totalorder %s15, 9
      %p108 = pnand %p106, %p107
      %p109 = pneg %p108
      // Predicated region
      $region9: #{tpu_custom_call.1} parent=5 // pred_check
        _
      $region10: #{tpu_custom_call.1} parent=5 // pred_check_branch
        %111 = sbr.rel (%p108) target = $region12
      $region11: #{tpu_custom_call.1} parent=5 // pred_region
        %s112 = ssub.s32 %s15, 1
      $region12: #{tpu_custom_call.1} parent=5 // pred_fallthru
        _
      %p113 = scmp.lt.s32.totalorder %s15, 8
      // Predicated region
      $region13: #{tpu_custom_call.1} parent=5 // pred_check
        %p114 = pneg %p113
      $region14: #{tpu_custom_call.1} parent=5 // pred_check_branch
        %116 = sbr.rel (%p114) target = $region16
      $region15: #{tpu_custom_call.1} parent=5 // pred_region
        // Predicated region
        $region17: #{tpu_custom_call.1} parent=15 // pred_check
          %p117 = pneg %p39
        $region18: #{tpu_custom_call.1} parent=15 // pred_check_branch
          %119 = sbr.rel (%p117) target = $region20
        $region19: #{tpu_custom_call.1} parent=15 // pred_region
          %s120 = sand.u32 %s29, 1
          %s121 = scalar_lea.sflag [#allocation7], %s120
          %s122 = sand.u32 %s29, 1
          %s123 = smul.addr %s122, 8
          %s124 = scalar_lea.vmem [#allocation6], %s123
          %p125 = scmp.lt.s32.totalorder %s15, 2
          %s126 = scalar_select %p125, %s15, 2
          %128 = vsyncadd %s121, 0
          %s129 = smul.addr %s126, 8
          %s130 = scalar_lea.hbm %s0, %s129
          %s132 = sshll.u32 %s130, 4
          %s133 = int_to_ptr.hbm [resolvable:$true] %s132
          %s134 = sshll.u32 %s124, 4
          %s135 = int_to_ptr.vmem [resolvable:$true] %s134
          %137 = dma.hbm_to_vmem [thread:$0]  %s133, 128, %s135, %s121
        $region20: #{tpu_custom_call.1} parent=15 // pred_fallthru
          _
        // Predicated region
        $region21: #{tpu_custom_call.1} parent=15 // pred_check
          %p138 = pneg %p71
        $region22: #{tpu_custom_call.1} parent=15 // pred_check_branch
          %140 = sbr.rel (%p138) target = $region24
        $region23: #{tpu_custom_call.1} parent=15 // pred_region
          %s141 = sand.u32 %s61, 1
          %s142 = scalar_lea.sflag [#allocation10], %s141
          %s143 = sand.u32 %s61, 1
          %s144 = smul.addr %s143, 8
          %s145 = scalar_lea.vmem [#allocation9], %s144
          %s146 = ssub.s32 %s15, 3
          %p147 = scmp.gt.s32.totalorder %s146, 0
          %s148 = scalar_select %p147, %s146, 0
          %150 = vsyncadd %s142, 0
          %s151 = smul.addr %s148, 8
          %s152 = scalar_lea.hbm %s1, %s151
          %s154 = sshll.u32 %s152, 4
          %s155 = int_to_ptr.hbm [resolvable:$true] %s154
          %s156 = sshll.u32 %s145, 4
          %s157 = int_to_ptr.vmem [resolvable:$true] %s156
          %159 = dma.hbm_to_vmem [thread:$0]  %s155, 128, %s157, %s142
        $region24: #{tpu_custom_call.1} parent=15 // pred_fallthru
          _
      $region16: #{tpu_custom_call.1} parent=5 // pred_fallthru
        _
      %p160 = scmp.le.s32.totalorder 1, %s15
      %p161 = scmp.lt.s32.totalorder %s15, 9
      %p162 = pnand %p160, %p161
      %p163 = pneg %p162
      // Predicated region
      $region25: #{tpu_custom_call.1} parent=5 // pred_check
        _
      $region26: #{tpu_custom_call.1} parent=5 // pred_check_branch
        %165 = sbr.rel (%p162) target = $region28
      $region27: #{tpu_custom_call.1} parent=5 // pred_region
        %s166 = ssub.s32 %s15, 1
        %s167 = sand.u32 %s32, 1
        %s168 = scalar_lea.sflag [#allocation7], %s167
        %s169 = sand.u32 %s32, 1
        %s170 = smul.addr %s169, 8
        %s171 = scalar_lea.vmem [#allocation6], %s170
        // Predicated region
        $region29: #{tpu_custom_call.1} parent=27 // pred_check
          %p172 = pneg %p45
        $region30: #{tpu_custom_call.1} parent=27 // pred_check_branch
          %174 = sbr.rel (%p172) target = $region32
        $region31: #{tpu_custom_call.1} parent=27 // pred_region
          %176 = dma.done %s168, 128
        $region32: #{tpu_custom_call.1} parent=27 // pred_fallthru
          _
        %s177 = sand.u32 %s64, 1
        %s178 = scalar_lea.sflag [#allocation10], %s177
        %s179 = sand.u32 %s64, 1
        %s180 = smul.addr %s179, 8
        %s181 = scalar_lea.vmem [#allocation9], %s180
        // Predicated region
        $region33: #{tpu_custom_call.1} parent=27 // pred_check
          %p182 = pneg %p77
        $region34: #{tpu_custom_call.1} parent=27 // pred_check_branch
          %184 = sbr.rel (%p182) target = $region36
        $region35: #{tpu_custom_call.1} parent=27 // pred_region
          %186 = dma.done %s178, 128
        $region36: #{tpu_custom_call.1} parent=27 // pred_fallthru
          _
        %s187 = sand.u32 %s32, 1
        %s188 = scalar_lea.sflag [#allocation7], %s187
        %s189 = sand.u32 %s32, 1
        %s190 = smul.addr %s189, 8
        %s191 = scalar_lea.vmem [#allocation6], %s190
        %p192 = pneg %p45
        %p193 = pneg %p42
        %s194 = sand.u32 %s64, 1
        %s195 = scalar_lea.sflag [#allocation10], %s194
        %s196 = sand.u32 %s64, 1
        %s197 = smul.addr %s196, 8
        %s198 = scalar_lea.vmem [#allocation9], %s197
        %p199 = pneg %p77
        %p200 = pneg %p74
        %p201 = pneg %p98
        %p202 = pneg %p95
        %p203 = scmp.lt.s32.totalorder %s20, 2
        %s204 = scalar_select %p203, %s20, 2
        %s205 = ssub.s32 %s20, 3
        %p206 = scmp.gt.s32.totalorder %s205, 0
        %s207 = scalar_select %p206, %s205, 0
        %p208 = scmp.eq.s32.totalorder %s20, 0
        // Predicated region
        $region37: #{tpu_custom_call.1} parent=27 // pred_check
          %p209 = pneg %p208
        $region38: #{tpu_custom_call.1} parent=27 // pred_check_branch
          %211 = sbr.rel (%p209) target = $region40
        $region39: #{tpu_custom_call.1} parent=27 // pred_region
          %212 = vst [vmem:[#allocation2] sm:$0xff] -1e+30
          %213 = vst [vmem:[#allocation4] sm:$0xff] -1e+30
          %214 = vst [vmem:[#allocation3] sm:$0xff] 0.0
          %215 = vst [vmem:[#allocation5] sm:$0xff] 0.0
        $region40: #{tpu_custom_call.1} parent=27 // pred_fallthru
          _
        %p216 = scmp.lt.s32.totalorder %s20, 2
        // Predicated region
        $region41: #{tpu_custom_call.1} parent=27 // pred_check
          %p217 = pneg %p216
        $region42: #{tpu_custom_call.1} parent=27 // pred_check_branch
          %219 = sbr.rel (%p217) target = $region44
        $region43: #{tpu_custom_call.1} parent=27 // pred_region
          %v220 = vld [vmem:[%s171] sm:$0xff]
          %v221 = vsub.f32 1.25, %v220
          %v222 = vmax.f32 %v221, 0.0
          %v223 = vmul.f32 %v222, -64.0
          %v224 = vsub.f32 %v220, 0.75
          %v225 = vmul.f32 %v223, %v224
          %v226 = vld [vmem:[#allocation2] sm:$0xff]
          %v227 = vmax.f32 %v226, %v225
          %v228 = vsub.f32 %v225, %v227
          %v229 = vmul.f32 %v228, 1.442695
          %v230 = vpow.pop %v229
          %v231 = vadd.f32 %v230, 0.0
          %v232 = vld [vmem:[#allocation3] sm:$0xff]
          %v233 = vsub.f32 %v226, %v227
          %v234 = vmul.f32 %v233, 1.442695
          %v235 = vpow.pop %v234
          %v236 = vmul.f32 %v232, %v235
          %v237 = vadd.f32 %v236, %v231
          %238 = vst [vmem:[#allocation3] sm:$0xff] %v237
          %239 = vst [vmem:[#allocation2] sm:$0xff] %v227
        $region44: #{tpu_custom_call.1} parent=27 // pred_fallthru
          _
        %p240 = scmp.eq.s32.totalorder %s20, 2
        // Predicated region
        $region45: #{tpu_custom_call.1} parent=27 // pred_check
          %p241 = pneg %p240
        $region46: #{tpu_custom_call.1} parent=27 // pred_check_branch
          %243 = sbr.rel (%p241) target = $region48
        $region47: #{tpu_custom_call.1} parent=27 // pred_region
          %v244 = vld [vmem:[%s171] sm:$0xff]
          %v245 = vsub.f32 1.25, %v244
          %v246 = vmax.f32 %v245, 0.0
          %v247 = vmul.f32 %v246, -64.0
          %v248 = vsub.f32 %v244, 0.75
          %v249 = vmul.f32 %v247, %v248
          %v250 = vlaneseq
          %v251 = vshrl.u32 %v250, 7
          %v252 = vlaneseq
          %v253 = vand.u32 %v252, 127
          %v254 = vmul.u32 %v251, 128
          %v255 = vadd.s32 %v254, %v253
          %vm256 = vcmp.lt.s32.totalorder %v255, 452
          %v257 = vsel %vm256, %v249, -inf
          %v258 = vld [vmem:[#allocation2] sm:$0xff]
          %v259 = vmax.f32 %v258, %v257
          %v260 = vsub.f32 %v257, %v259
          %v261 = vmul.f32 %v260, 1.442695
          %v262 = vpow.pop %v261
          %v263 = vadd.f32 %v262, 0.0
          %v264 = vld [vmem:[#allocation3] sm:$0xff]
          %v265 = vsub.f32 %v258, %v259
          %v266 = vmul.f32 %v265, 1.442695
          %v267 = vpow.pop %v266
          %v268 = vmul.f32 %v264, %v267
          %v269 = vadd.f32 %v268, %v263
          %270 = vst [vmem:[#allocation3] sm:$0xff] %v269
          %271 = vst [vmem:[#allocation2] sm:$0xff] %v259
        $region48: #{tpu_custom_call.1} parent=27 // pred_fallthru
          _
        %p272 = scmp.ge.s32.totalorder %s20, 3
        %p273 = scmp.lt.s32.totalorder %s20, 7
        %p274 = pnand %p272, %p273
        %p275 = pneg %p274
        // Predicated region
        $region49: #{tpu_custom_call.1} parent=27 // pred_check
          _
        $region50: #{tpu_custom_call.1} parent=27 // pred_check_branch
          %277 = sbr.rel (%p274) target = $region52
        $region51: #{tpu_custom_call.1} parent=27 // pred_region
          %v278 = vld [vmem:[%s181] sm:$0xff]
          %v279 = vadd.f32 %v278, 0.25
          %v280 = vmax.f32 %v279, 0.0
          %v281 = vmul.f32 %v280, 64.0
          %v282 = vsub.f32 %v278, 0.25
          %v283 = vmul.f32 %v281, %v282
          %v284 = vld [vmem:[#allocation4] sm:$0xff]
          %v285 = vmax.f32 %v284, %v283
          %v286 = vsub.f32 %v283, %v285
          %v287 = vmul.f32 %v286, 1.442695
          %v288 = vpow.pop %v287
          %v289 = vadd.f32 %v288, 0.0
          %v290 = vld [vmem:[#allocation5] sm:$0xff]
          %v291 = vsub.f32 %v284, %v285
          %v292 = vmul.f32 %v291, 1.442695
          %v293 = vpow.pop %v292
          %v294 = vmul.f32 %v290, %v293
          %v295 = vadd.f32 %v294, %v289
          %296 = vst [vmem:[#allocation5] sm:$0xff] %v295
          %297 = vst [vmem:[#allocation4] sm:$0xff] %v285
        $region52: #{tpu_custom_call.1} parent=27 // pred_fallthru
          _
        %p298 = scmp.eq.s32.totalorder %s20, 7
        // Predicated region
        $region53: #{tpu_custom_call.1} parent=27 // pred_check
          %p299 = pneg %p298
        $region54: #{tpu_custom_call.1} parent=27 // pred_check_branch
          %301 = sbr.rel (%p299) target = $region56
        $region55: #{tpu_custom_call.1} parent=27 // pred_region
          %v302 = vld [vmem:[%s181] sm:$0xff]
          %v303 = vadd.f32 %v302, 0.25
          %v304 = vmax.f32 %v303, 0.0
          %v305 = vmul.f32 %v304, 64.0
          %v306 = vsub.f32 %v302, 0.25
          %v307 = vmul.f32 %v305, %v306
          %v308 = vlaneseq
          %v309 = vshrl.u32 %v308, 7
          %v310 = vlaneseq
          %v311 = vand.u32 %v310, 127
          %v312 = vmul.u32 %v309, 128
          %v313 = vadd.s32 %v312, %v311
          %vm314 = vcmp.lt.s32.totalorder %v313, 904
          %v315 = vsel %vm314, %v307, -inf
          %v316 = vld [vmem:[#allocation4] sm:$0xff]
          %v317 = vmax.f32 %v316, %v315
          %v318 = vsub.f32 %v315, %v317
          %v319 = vmul.f32 %v318, 1.442695
          %v320 = vpow.pop %v319
          %v321 = vadd.f32 %v320, 0.0
          %v322 = vld [vmem:[#allocation5] sm:$0xff]
          %v323 = vsub.f32 %v316, %v317
          %v324 = vmul.f32 %v323, 1.442695
          %v325 = vpow.pop %v324
          %v326 = vmul.f32 %v322, %v325
          %v327 = vadd.f32 %v326, %v321
          %328 = vst [vmem:[#allocation5] sm:$0xff] %v327
          %329 = vst [vmem:[#allocation4] sm:$0xff] %v317
          %v330 = vld [vmem:[#allocation2] sm:$0xff]
          %v331 = vld [vmem:[#allocation4] sm:$0xff]
          %332 = vmax.xlane.f32.xlu0 %v330
          %v333 = vpop.xlane.xlu0 %332
          %v334 = vrot.slane %v333, 4
          %v335 = vmax.f32 %v333, %v334
          %v336 = vrot.slane %v335, 2
          %v337 = vmax.f32 %v335, %v336
          %v338 = vrot.slane %v337, 1
          %v339 = vmax.f32 %v337, %v338
          %s340 = vtos %v339
          %v341 = vstv %s340
          %342 = vmax.xlane.f32.xlu0 %v331
          %v343 = vpop.xlane.xlu0 %342
          %v344 = vrot.slane %v343, 4
          %v345 = vmax.f32 %v343, %v344
          %v346 = vrot.slane %v345, 2
          %v347 = vmax.f32 %v345, %v346
          %v348 = vrot.slane %v347, 1
          %v349 = vmax.f32 %v347, %v348
          %s350 = vtos %v349
          %v351 = vstv %s350
          %v352 = vld [vmem:[#allocation3] sm:$0xff]
          %v353 = vsub.f32 %v330, %v341
          %v354 = vmul.f32 %v353, 1.442695
          %v355 = vpow.pop %v354
          %v356 = vmul.f32 %v352, %v355
          %357 = vadd.xlane.f32.xlu0 %v356
          %v358 = vpop.xlane.xlu0 %357
          %v359 = vrot.slane %v358, 4
          %v360 = vadd.f32 %v358, %v359
          %v361 = vrot.slane %v360, 2
          %v362 = vadd.f32 %v360, %v361
          %v363 = vrot.slane %v362, 1
          %v364 = vadd.f32 %v362, %v363
          %s365 = vtos %v364
          %v366 = vstv %s365
          %v367 = vld [vmem:[#allocation5] sm:$0xff]
          %v368 = vsub.f32 %v331, %v351
          %v369 = vmul.f32 %v368, 1.442695
          %v370 = vpow.pop %v369
          %v371 = vmul.f32 %v367, %v370
          %372 = vadd.xlane.f32.xlu0 %v371
          %v373 = vpop.xlane.xlu0 %372
          %v374 = vrot.slane %v373, 4
          %v375 = vadd.f32 %v373, %v374
          %v376 = vrot.slane %v375, 2
          %v377 = vadd.f32 %v375, %v376
          %v378 = vrot.slane %v377, 1
          %v379 = vadd.f32 %v377, %v378
          %s380 = vtos %v379
          %v381 = vstv %s380
          %v382 = vadd.f32 %v341, %v351
          %v383 = vmul.f32 %v366, %v381
          %v384 = vlog2.pop %v383
          %v385 = vmul.f32 %v384, 0.6931472
          %v386 = vadd.f32 %v382, %v385
          %v387 = vmax.f32 %v386, 0.0
          %v388 = vand.u32 2147483647, %v386
          %v389 = vsub.f32 0.0, %v388
          %v390 = vmul.f32 %v389, 1.442695
          %v391 = vpow.pop %v390
          %v392 = vadd.f32 %v391, 1.0
          %v393 = vlog2.pop %v392
          %v394 = vmul.f32 %v393, 0.6931472
          %v395 = vmul.f32 -0.5, %v391
          %v396 = vadd.f32 %v395, 1.0
          %v397 = vmul.f32 %v396, %v391
          %v398 = vand.u32 2147483647, %v391
          %vm399 = vcmp.lt.f32.partialorder %v398, 0.0004427343
          %v400 = vsel %vm399, %v397, %v394
          %v401 = vadd.f32 %v387, %v400
          %vm402 = vcmask 0
          %403 = vst.msk [vmem:[#allocation11] sm:$0x1] %vm402, %v401
        $region56: #{tpu_custom_call.1} parent=27 // pred_fallthru
          _
        // Predicated region
        $region57: #{tpu_custom_call.1} parent=27 // pred_check
          %p404 = pneg %p95
        $region58: #{tpu_custom_call.1} parent=27 // pred_check_branch
          %406 = sbr.rel (%p404) target = $region60
        $region59: #{tpu_custom_call.1} parent=27 // pred_region
          %408 = vsyncadd [#allocation8], 0
          %s410 = sshll.u32 [#allocation11], 4
          %s411 = int_to_ptr.vmem [resolvable:$true] %s410
          %s412 = sshll.u32 %s2, 4
          %s413 = int_to_ptr.hbm [resolvable:$true] %s412
          %415 = dma.vmem_to_hbm [thread:$0]  %s411, 16, %s413, [#allocation8]
        $region60: #{tpu_custom_call.1} parent=27 // pred_fallthru
          _
        // Predicated region
        $region61: #{tpu_custom_call.1} parent=27 // pred_check
          %p416 = pneg %p95
        $region62: #{tpu_custom_call.1} parent=27 // pred_check_branch
          %418 = sbr.rel (%p416) target = $region64
        $region63: #{tpu_custom_call.1} parent=27 // pred_region
          %420 = dma.done [#allocation8], 16
        $region64: #{tpu_custom_call.1} parent=27 // pred_fallthru
          _
      $region28: #{tpu_custom_call.1} parent=5 // pred_fallthru
        _
      %p421 = scmp.le.s32.totalorder 2, %s15
      // Predicated region
      $region65: #{tpu_custom_call.1} parent=5 // pred_check
        %p422 = pneg %p421
      $region66: #{tpu_custom_call.1} parent=5 // pred_check_branch
        %424 = sbr.rel (%p422) target = $region68
      $region67: #{tpu_custom_call.1} parent=5 // pred_region
        %s425 = ssub.s32 %s15, 2
      $region68: #{tpu_custom_call.1} parent=5 // pred_fallthru
        _
    $region6: #{tpu_custom_call.1} parent=1 // loop_footer
      %s19 = sadd.s32 1, %s15
    $region7: #{tpu_custom_call.1} parent=1 // loop_footer_branch
      %14 = sbr.rel target = $region3
    $region8: #{tpu_custom_call.1} parent=1 // loop_exit
      _
    %426 = vsyncpa [#allocation7], 1
    %s427 = scalar_lea.sflag [#allocation7], 1
    %428 = vsyncpa %s427, 1
    %429 = vsyncpa [#allocation10], 1
    %s430 = scalar_lea.sflag [#allocation10], 1
    %431 = vsyncpa %s430, 1
    %432 = vsyncpa [#allocation8], 1
    %s433 = scalar_lea.sflag [#allocation8], 1
    %434 = vsyncpa %s433, 1

</llo_original>
